<compile_context>
chip_gen: v7x
topology: tpu7x:2x2x1
jax: 0.10.0
libtpu: 0.0.40
codegen_flags: <defaults>
</compile_context>

<pallas_src>
import functools

import jax
import jax.numpy as jnp
from jax import lax
from jax.experimental import pallas as pl
from jax.experimental.pallas import tpu as pltpu

EPS = 1e-5


def _gn_kernel(x_ref, w_ref, b_ref, o_ref, *, rows_per_group, eps):
    # x_ref / o_ref: (Rb, HW)  -- Rb whole channels (= Rb/rows_per_group groups)
    # w_ref / b_ref: (Rb, 1)   -- per-channel affine params for these rows
    rb, hw = x_ref.shape
    d = rows_per_group

    x = x_ref[...]
    xf = x.astype(jnp.float32)

    # ---- fused one-pass statistics -----------------------------------
    row_s = jnp.sum(xf, axis=1, keepdims=True)          # (Rb, 1)
    row_s2 = jnp.sum(xf * xf, axis=1, keepdims=True)    # (Rb, 1)

    # Per-group sums replicated back onto every row of the group via a tiny
    # block-diagonal (same-group) matmul -- avoids reshapes / relayouts and
    # integer division on vectors.
    ri = lax.broadcasted_iota(jnp.int32, (rb, rb), 0)
    ci = lax.broadcasted_iota(jnp.int32, (rb, rb), 1)
    inv_d = 1.0 / d
    gi = jnp.floor((ri.astype(jnp.float32) + 0.5) * inv_d)
    gj = jnp.floor((ci.astype(jnp.float32) + 0.5) * inv_d)
    same_group = (gi == gj).astype(jnp.float32)          # (Rb, Rb)

    g_s = jnp.dot(same_group, row_s, preferred_element_type=jnp.float32)
    g_s2 = jnp.dot(same_group, row_s2, preferred_element_type=jnp.float32)

    inv_n = 1.0 / (d * hw)
    mean = g_s * inv_n                                   # (Rb, 1)
    # population variance (correction=0); clamp tiny negative from cancellation
    var = jnp.maximum(g_s2 * inv_n - mean * mean, 0.0)
    rstd = lax.rsqrt(var + eps)                          # (Rb, 1)

    # ---- folded normalize + affine: out = x * a + c -------------------
    w = w_ref[...].astype(jnp.float32)                   # (Rb, 1)
    b = b_ref[...].astype(jnp.float32)                   # (Rb, 1)
    a = rstd * w
    c = b - mean * a

    if x.dtype == jnp.bfloat16:
        # bf16 VALU path (v6e/v7x): keep the big elementwise pass in bf16.
        out = x * a.astype(jnp.bfloat16) + c.astype(jnp.bfloat16)
    else:
        out = xf * a + c
    o_ref[...] = out.astype(o_ref.dtype)


def _choose_row_block(num_rows, rows_per_group, row_bytes,
                      target_block_bytes=3 * 1024 * 1024,
                      max_rows=512):
    """Rows per block: whole groups only, (8 | Rb) or Rb == num_rows,
    divides num_rows, fits the VMEM budget; prefer >= 2 grid steps."""
    d = rows_per_group
    cands = [r for r in range(d, num_rows + 1, d)
             if num_rows % r == 0 and (r % 8 == 0 or r == num_rows)]
    within = [r for r in cands
              if r * row_bytes <= target_block_bytes and r <= max_rows]
    multi = [r for r in within if num_rows // r >= 2]
    if multi:
        return max(multi)
    if within:
        return max(within)
    return min(cands)


def group_norm_naive(x, weight, bias, num_groups, eps=EPS):
    """GN_Naive.forward: x is NCHW, weight/bias are (C,)."""
    N, C, H, W = x.shape
    G = num_groups
    assert C % G == 0, "channels must be divisible by num_groups"
    D = C // G
    HW = H * W
    NC = N * C

    # Lane-dense 2-D slab: one row per (sample, channel), spatial along lanes.
    x2 = x.reshape(NC, HW)
    w2 = jnp.tile(weight.astype(jnp.float32), N).reshape(NC, 1)
    b2 = jnp.tile(bias.astype(jnp.float32), N).reshape(NC, 1)

    row_bytes = HW * jnp.dtype(x.dtype).itemsize
    Rb = _choose_row_block(NC, D, row_bytes)
    num_steps = NC // Rb
    block_bytes = Rb * row_bytes

    vmem_limit = int(min(128 * 1024 * 1024,
                         max(32 * 1024 * 1024,
                             6 * block_bytes + 4 * 1024 * 1024)))

    kernel = functools.partial(_gn_kernel, rows_per_group=D, eps=eps)

    out = pl.pallas_call(
        kernel,
        out_shape=jax.ShapeDtypeStruct((NC, HW), x.dtype),
        grid_spec=pltpu.PrefetchScalarGridSpec(
            num_scalar_prefetch=0,
            grid=(num_steps,),
            in_specs=[
                pl.BlockSpec((Rb, HW), lambda i: (i, 0)),
                pl.BlockSpec((Rb, 1), lambda i: (i, 0)),
                pl.BlockSpec((Rb, 1), lambda i: (i, 0)),
            ],
            out_specs=pl.BlockSpec((Rb, HW), lambda i: (i, 0)),
        ),
        compiler_params=pltpu.CompilerParams(
            dimension_semantics=("parallel",),
            vmem_limit_bytes=vmem_limit,
        ),
    )(x2, w2, b2)

    return out.reshape(N, C, H, W)


def _reference(x, weight, bias, num_groups):
    # pure-JAX reference mirroring the PyTorch module exactly
    N, C, H, W = x.shape
    G = num_groups
    xr = x.reshape(N, G, H * W * C // G)
    means = jnp.mean(xr, axis=2, keepdims=True)
    var = jnp.mean((xr - means) ** 2, axis=2, keepdims=True)
    rstds = lax.rsqrt(var + EPS)
    xnorm = (xr - means) * rstds
    return (
        xnorm.reshape(N, C, H, W)
        * weight[None, :, None, None]
        + bias[None, :, None, None]
    )


if __name__ == "__main__":
    key = jax.random.PRNGKey(0)
    N, C, H, W = 2, 4, 16, 16
    G = 2

    x = jax.random.normal(key, (N, C, H, W), dtype=jnp.float32)
    # Deterministic parameter init matching nn.Parameter(torch.ones/zeros),
    # perturbed slightly so the affine path is exercised.
    weight = jnp.ones((C,), dtype=jnp.float32) + 0.1 * jnp.arange(C, dtype=jnp.float32)
    bias = jnp.zeros((C,), dtype=jnp.float32) + 0.01 * jnp.arange(C, dtype=jnp.float32)

    out = group_norm_naive(x, weight, bias, G)
    out = jax.block_until_ready(out)

    ref = _reference(x, weight, bias, G)
    assert out.shape == (N, C, H, W)
    max_err = float(jnp.max(jnp.abs(out - ref)))
    assert jnp.allclose(out, ref, atol=1e-5, rtol=1e-5), max_err

    print("KERNEL_OK")
</pallas_src>

<mosaic_0001>
module attributes {stable_mosaic.version = 11 : i64} {
  func.func @_gn_kernel(%arg0: i32, %arg1: memref<8x256xf32, #tpu.memory_space<vmem>>, %arg2: memref<8x1xf32, #tpu.memory_space<vmem>>, %arg3: memref<8x1xf32, #tpu.memory_space<vmem>>, %arg4: memref<8x256xf32, #tpu.memory_space<vmem>>) attributes {dimension_semantics = [#tpu.dimension_semantics<parallel>], iteration_bounds = array<i64: 1>, scalar_prefetch = 0 : i64, scratch_operands = 0 : i64, tpu.core_type = #tpu.core_type<tc>, window_params = [{transform_indices = @transform_0, window_bounds = array<i64: 8, 256>}, {transform_indices = @transform_1, window_bounds = array<i64: 8, 1>}, {transform_indices = @transform_2, window_bounds = array<i64: 8, 1>}, {transform_indices = @transform_3, window_bounds = array<i64: 8, 256>}]} {
    %c0 = arith.constant 0 : index
    %c0_0 = arith.constant 0 : index
    %0 = vector.load %arg1[%c0, %c0_0] : memref<8x256xf32, #tpu.memory_space<vmem>>, vector<8x256xf32>
    %cst = arith.constant dense<0.000000e+00> : vector<8xf32>
    %1 = vector.multi_reduction <add>, %0, %cst [1] : vector<8x256xf32> to vector<8xf32>
    %2 = vector.shape_cast %1 : vector<8xf32> to vector<8x1xf32>
    %3 = arith.mulf %0, %0 : vector<8x256xf32>
    %cst_1 = arith.constant dense<0.000000e+00> : vector<8xf32>
    %4 = vector.multi_reduction <add>, %3, %cst_1 [1] : vector<8x256xf32> to vector<8xf32>
    %5 = vector.shape_cast %4 : vector<8xf32> to vector<8x1xf32>
    %6 = tpu.iota {dimensions = array<i32: 0>} : vector<8x8xi32>
    %7 = tpu.iota {dimensions = array<i32: 1>} : vector<8x8xi32>
    %8 = arith.sitofp %6 : vector<8x8xi32> to vector<8x8xf32>
    %cst_2 = arith.constant 5.000000e-01 : f32
    %9 = vector.broadcast %cst_2 : f32 to vector<8x8xf32>
    %10 = arith.addf %8, %9 : vector<8x8xf32>
    %cst_3 = arith.constant 5.000000e-01 : f32
    %11 = vector.broadcast %cst_3 : f32 to vector<8x8xf32>
    %12 = arith.mulf %10, %11 : vector<8x8xf32>
    %13 = math.floor %12 : vector<8x8xf32>
    %14 = arith.sitofp %7 : vector<8x8xi32> to vector<8x8xf32>
    %cst_4 = arith.constant 5.000000e-01 : f32
    %15 = vector.broadcast %cst_4 : f32 to vector<8x8xf32>
    %16 = arith.addf %14, %15 : vector<8x8xf32>
    %cst_5 = arith.constant 5.000000e-01 : f32
    %17 = vector.broadcast %cst_5 : f32 to vector<8x8xf32>
    %18 = arith.mulf %16, %17 : vector<8x8xf32>
    %19 = math.floor %18 : vector<8x8xf32>
    %20 = arith.cmpf oeq, %13, %19 : vector<8x8xf32>
    %21 = arith.extui %20 : vector<8x8xi1> to vector<8x8xi32>
    %22 = arith.sitofp %21 : vector<8x8xi32> to vector<8x8xf32>
    %cst_6 = arith.constant dense<0.000000e+00> : vector<8x1xf32>
    %23 = tpu.matmul %22, %2, %cst_6 {dimension_numbers = #tpu.dot_dimension_numbers<[1], [0], [0], [1], [0, 0, 1, 1], [], []>} : vector<8x8xf32>, vector<8x1xf32>, vector<8x1xf32> -> vector<8x1xf32>
    %cst_7 = arith.constant dense<0.000000e+00> : vector<8x1xf32>
    %24 = tpu.matmul %22, %5, %cst_7 {dimension_numbers = #tpu.dot_dimension_numbers<[1], [0], [0], [1], [0, 0, 1, 1], [], []>} : vector<8x8xf32>, vector<8x1xf32>, vector<8x1xf32> -> vector<8x1xf32>
    %cst_8 = arith.constant 0.001953125 : f32
    %25 = vector.broadcast %cst_8 : f32 to vector<8x1xf32>
    %26 = arith.mulf %23, %25 : vector<8x1xf32>
    %cst_9 = arith.constant 0.001953125 : f32
    %27 = vector.broadcast %cst_9 : f32 to vector<8x1xf32>
    %28 = arith.mulf %24, %27 : vector<8x1xf32>
    %29 = arith.mulf %26, %26 : vector<8x1xf32>
    %30 = arith.subf %28, %29 : vector<8x1xf32>
    %cst_10 = arith.constant 0.000000e+00 : f32
    %31 = vector.broadcast %cst_10 : f32 to vector<8x1xf32>
    %32 = arith.maximumf %30, %31 : vector<8x1xf32>
    %cst_11 = arith.constant 9.99999974E-6 : f32
    %33 = vector.broadcast %cst_11 : f32 to vector<8x1xf32>
    %34 = arith.addf %32, %33 : vector<8x1xf32>
    %35 = math.rsqrt %34 : vector<8x1xf32>
    %c0_12 = arith.constant 0 : index
    %c0_13 = arith.constant 0 : index
    %36 = vector.load %arg2[%c0_12, %c0_13] : memref<8x1xf32, #tpu.memory_space<vmem>>, vector<8x1xf32>
    %c0_14 = arith.constant 0 : index
    %c0_15 = arith.constant 0 : index
    %37 = vector.load %arg3[%c0_14, %c0_15] : memref<8x1xf32, #tpu.memory_space<vmem>>, vector<8x1xf32>
    %38 = arith.mulf %35, %36 : vector<8x1xf32>
    %39 = arith.mulf %26, %38 : vector<8x1xf32>
    %40 = arith.subf %37, %39 : vector<8x1xf32>
    %41 = vector.broadcast %38 : vector<8x1xf32> to vector<8x256xf32>
    %42 = arith.mulf %0, %41 : vector<8x256xf32>
    %43 = vector.broadcast %40 : vector<8x1xf32> to vector<8x256xf32>
    %44 = arith.addf %42, %43 : vector<8x256xf32>
    %c0_16 = arith.constant 0 : index
    %c0_17 = arith.constant 0 : index
    %45 = vector.load %arg4[%c0_16, %c0_17] : memref<8x256xf32, #tpu.memory_space<vmem>>, vector<8x256xf32>
    tpu.vector_store %arg4[%c0_16, %c0_17], %44 {strides = array<i32>} : memref<8x256xf32, #tpu.memory_space<vmem>>, vector<8x256xf32>,
    return
  }
  func.func @transform_0(%arg0: i32) -> (i32, i32) {
    %c0_i32 = arith.constant 0 : i32
    %c0_i32_0 = arith.constant 0 : i32
    return %arg0, %c0_i32 : i32, i32
  }
  func.func @transform_1(%arg0: i32) -> (i32, i32) {
    %c0_i32 = arith.constant 0 : i32
    %c0_i32_0 = arith.constant 0 : i32
    return %arg0, %c0_i32 : i32, i32
  }
  func.func @transform_2(%arg0: i32) -> (i32, i32) {
    %c0_i32 = arith.constant 0 : i32
    %c0_i32_0 = arith.constant 0 : i32
    return %arg0, %c0_i32 : i32, i32
  }
  func.func @transform_3(%arg0: i32) -> (i32, i32) {
    %c0_i32 = arith.constant 0 : i32
    %c0_i32_0 = arith.constant 0 : i32
    return %arg0, %c0_i32 : i32, i32
  }
}

</mosaic_0001>

<llo_original>
// kernel: tpu_custom_call.1
$region0: #{tpu_custom_call.1}
  #allocation0 [shape = 'u32[]', space=smem, size = 0x4, offset = 0x4, fixed_abs, tag = 'smem constant byte address 0x4 - core index']
  #allocation1 [shape = 'u32[144,128]{1,0:T(1,128)}', space=vmem, size = 0x12000, scoped, tag = 'internal scratch']
  %s0 = inlined_call_operand.vmem [shape: f32[8,256], index: 0, kind: input, shape index: {}]
  %s1 = inlined_call_operand.vmem [shape: f32[8,1], index: 1, kind: input, shape index: {}]
  %s2 = inlined_call_operand.vmem [shape: f32[8,1], index: 2, kind: input, shape index: {}]
  %s3 = inlined_call_operand.hbm [shape: f32[8,256], index: 3, kind: output, shape index: {}]
  %s4 = sld [smem:[#allocation0]]
  $region22: #{tpu_custom_call.1} parent=0
    _
  %s6 = ssub.s32 1, %s4
  %s7 = scalar_select 0, %s6, %s4
  $region1: #{tpu_custom_call.1} parent=0
    #allocation2 [shape = 'u8[8192]{0}', space=vmem, size = 0x2000, scoped, tag = 'output window, operand 0, single buffered']
    #allocation3 [shape = 's32[1]{0}', space=sflag, size = 0x4, scoped, tag = 'scoped memory for tpu_custom_call.1']
    %8 = vsyncpa [#allocation3], 0
    // Predicated region
    $region2: #{tpu_custom_call.1} parent=1 // pred_check
      _
    $region3: #{tpu_custom_call.1} parent=1 // pred_check_branch
      %10 = sbr.rel (0) target = $region5
    $region4: #{tpu_custom_call.1} parent=1 // pred_region
      _
    $region5: #{tpu_custom_call.1} parent=1 // pred_fallthru
      _
    // Predicated region
    $region6: #{tpu_custom_call.1} parent=1 // pred_check
      _
    $region7: #{tpu_custom_call.1} parent=1 // pred_check_branch
      %12 = sbr.rel (0) target = $region9
    $region8: #{tpu_custom_call.1} parent=1 // pred_region
      _
    $region9: #{tpu_custom_call.1} parent=1 // pred_fallthru
      _
    // Predicated region
    $region10: #{tpu_custom_call.1} parent=1 // pred_check
      _
    $region11: #{tpu_custom_call.1} parent=1 // pred_check_branch
      %14 = sbr.rel (0) target = $region13
    $region12: #{tpu_custom_call.1} parent=1 // pred_region
      _
    $region13: #{tpu_custom_call.1} parent=1 // pred_fallthru
      _
    %v15 = vld [vmem:[%s0] sm:$0xff]
    %v16 = vld [vmem:[%s0 + $0x8] sm:$0xff]
    %v17 = vadd.f32 %v15, %v16
    %18 = vadd.xlane.f32.xlu0 %v17
    %v19 = vpop.xlane.xlu0 %18
    %v20 = vmul.f32 %v15, %v15
    %v21 = vmul.f32 %v16, %v16
    %v22 = vadd.f32 %v20, %v21
    %23 = vadd.xlane.f32.xlu0 %v22
    %v24 = vpop.xlane.xlu0 %23
    %v25 = vlaneseq
    %v26 = vshrl.u32 %v25, 7
    %v27 = vlaneseq
    %v28 = vand.u32 %v27, 127
    %v29 = vcvt.s32.f32 %v26
    %v30 = vadd.f32 %v29, 0.5
    %v31 = vmul.f32 %v30, 0.5
    %v32 = vfloor.f32 %v31
    %v33 = vcvt.s32.f32 %v28
    %v34 = vadd.f32 %v33, 0.5
    %v35 = vmul.f32 %v34, 0.5
    %v36 = vfloor.f32 %v35
    %vm37 = vcmp.eq.f32.partialorder %v32, %v36
    %v38 = vsel %vm37, 1, 0
    %v39 = vcvt.s32.f32 %v38
    %vm40 = vcmask 64512
    %v42 = vsel %vm40, %v39, 0
    %44 = vmatprep.subr.mxu0 0.0
    %45 = vmatpush1.msra.mxu0 %v19
    %46 = vmatprep.subr.mxu0 0.0
    %47 = vmatpush1.msra.mxu0 0.0
    %48 = vmatprep.subr.mxu0 0.0
    %49 = vmatpush1.msra.mxu0 0.0
    %50 = vmatprep.subr.mxu0 0.0
    %51 = vmatpush1.msra.mxu0 0.0
    %52 = vmatprep.subr.mxu0 0.0
    %53 = vmatpush1.msra.mxu0 0.0
    %54 = vmatprep.subr.mxu0 0.0
    %55 = vmatpush1.msra.mxu0 0.0
    %56 = vmatprep.subr.mxu0 0.0
    %57 = vmatpush1.msra.mxu0 0.0
    %58 = vmatprep.subr.mxu0 0.0
    %59 = vmatpush1.msra.mxu0 0.0
    %60 = vmatprep.subr.mxu0 0.0
    %61 = vmatpush1.msra.mxu0 0.0
    %62 = vmatprep.subr.mxu0 0.0
    %63 = vmatpush1.msra.mxu0 0.0
    %64 = vmatprep.subr.mxu0 0.0
    %65 = vmatpush1.msra.mxu0 0.0
    %66 = vmatprep.subr.mxu0 0.0
    %67 = vmatpush1.msra.mxu0 0.0
    %68 = vmatprep.subr.mxu0 0.0
    %69 = vmatpush1.msra.mxu0 0.0
    %70 = vmatprep.subr.mxu0 0.0
    %71 = vmatpush1.msra.mxu0 0.0
    %72 = vmatprep.subr.mxu0 0.0
    %73 = vmatpush1.msra.mxu0 0.0
    %74 = vmatprep.subr.mxu0 0.0
    %75 = vmatpush1.msra.mxu0 0.0
    %76 = vmatprep.subr.mxu0 0.0
    %77 = vmatpush1.msra.mxu0 0.0
    %78 = vmatprep.subr.mxu0 0.0
    %79 = vmatpush1.msra.mxu0 0.0
    %80 = vmatprep.subr.mxu0 0.0
    %81 = vmatpush1.msra.mxu0 0.0
    %82 = vmatprep.subr.mxu0 0.0
    %83 = vmatpush1.msra.mxu0 0.0
    %84 = vmatprep.subr.mxu0 0.0
    %85 = vmatpush1.msra.mxu0 0.0
    %86 = vmatprep.subr.mxu0 0.0
    %87 = vmatpush1.msra.mxu0 0.0
    %88 = vmatprep.subr.mxu0 0.0
    %89 = vmatpush1.msra.mxu0 0.0
    %90 = vmatprep.subr.mxu0 0.0
    %91 = vmatpush1.msra.mxu0 0.0
    %92 = vmatprep.subr.mxu0 0.0
    %93 = vmatpush1.msra.mxu0 0.0
    %94 = vmatprep.subr.mxu0 0.0
    %95 = vmatpush1.msra.mxu0 0.0
    %96 = vmatprep.subr.mxu0 0.0
    %97 = vmatpush1.msra.mxu0 0.0
    %98 = vmatprep.subr.mxu0 0.0
    %99 = vmatpush1.msra.mxu0 0.0
    %100 = vmatprep.subr.mxu0 0.0
    %101 = vmatpush1.msra.mxu0 0.0
    %102 = vmatprep.subr.mxu0 0.0
    %103 = vmatpush1.msra.mxu0 0.0
    %104 = vmatprep.subr.mxu0 0.0
    %105 = vmatpush1.msra.mxu0 0.0
    %106 = vmatprep.subr.mxu0 0.0
    %107 = vmatpush1.msra.mxu0 0.0
    %108 = vmatprep.mubr.f32.mxu0 0.0
    %109 = vmatmul.mubr.f32.gmra.mrb[0].mxu0 %v42
    %v110 = vpop.f32.mrb[0].mxu0
    %v111 = vadd.f32 0.0, %v110
    %v112 = vpop.f32.mrb[0].mxu0
    %113 = vdwg.mxu0
    %114 = vmatprep.subr.mxu0 0.0
    %115 = vmatpush1.msra.mxu0 %v24
    %116 = vmatprep.subr.mxu0 0.0
    %117 = vmatpush1.msra.mxu0 0.0
    %118 = vmatprep.subr.mxu0 0.0
    %119 = vmatpush1.msra.mxu0 0.0
    %120 = vmatprep.subr.mxu0 0.0
    %121 = vmatpush1.msra.mxu0 0.0
    %122 = vmatprep.subr.mxu0 0.0
    %123 = vmatpush1.msra.mxu0 0.0
    %124 = vmatprep.subr.mxu0 0.0
    %125 = vmatpush1.msra.mxu0 0.0
    %126 = vmatprep.subr.mxu0 0.0
    %127 = vmatpush1.msra.mxu0 0.0
    %128 = vmatprep.subr.mxu0 0.0
    %129 = vmatpush1.msra.mxu0 0.0
    %130 = vmatprep.subr.mxu0 0.0
    %131 = vmatpush1.msra.mxu0 0.0
    %132 = vmatprep.subr.mxu0 0.0
    %133 = vmatpush1.msra.mxu0 0.0
    %134 = vmatprep.subr.mxu0 0.0
    %135 = vmatpush1.msra.mxu0 0.0
    %136 = vmatprep.subr.mxu0 0.0
    %137 = vmatpush1.msra.mxu0 0.0
    %138 = vmatprep.subr.mxu0 0.0
    %139 = vmatpush1.msra.mxu0 0.0
    %140 = vmatprep.subr.mxu0 0.0
    %141 = vmatpush1.msra.mxu0 0.0
    %142 = vmatprep.subr.mxu0 0.0
    %143 = vmatpush1.msra.mxu0 0.0
    %144 = vmatprep.subr.mxu0 0.0
    %145 = vmatpush1.msra.mxu0 0.0
    %146 = vmatprep.subr.mxu0 0.0
    %147 = vmatpush1.msra.mxu0 0.0
    %148 = vmatprep.subr.mxu0 0.0
    %149 = vmatpush1.msra.mxu0 0.0
    %150 = vmatprep.subr.mxu0 0.0
    %151 = vmatpush1.msra.mxu0 0.0
    %152 = vmatprep.subr.mxu0 0.0
    %153 = vmatpush1.msra.mxu0 0.0
    %154 = vmatprep.subr.mxu0 0.0
    %155 = vmatpush1.msra.mxu0 0.0
    %156 = vmatprep.subr.mxu0 0.0
    %157 = vmatpush1.msra.mxu0 0.0
    %158 = vmatprep.subr.mxu0 0.0
    %159 = vmatpush1.msra.mxu0 0.0
    %160 = vmatprep.subr.mxu0 0.0
    %161 = vmatpush1.msra.mxu0 0.0
    %162 = vmatprep.subr.mxu0 0.0
    %163 = vmatpush1.msra.mxu0 0.0
    %164 = vmatprep.subr.mxu0 0.0
    %165 = vmatpush1.msra.mxu0 0.0
    %166 = vmatprep.subr.mxu0 0.0
    %167 = vmatpush1.msra.mxu0 0.0
    %168 = vmatprep.subr.mxu0 0.0
    %169 = vmatpush1.msra.mxu0 0.0
    %170 = vmatprep.subr.mxu0 0.0
    %171 = vmatpush1.msra.mxu0 0.0
    %172 = vmatprep.subr.mxu0 0.0
    %173 = vmatpush1.msra.mxu0 0.0
    %174 = vmatprep.subr.mxu0 0.0
    %175 = vmatpush1.msra.mxu0 0.0
    %176 = vmatprep.subr.mxu0 0.0
    %177 = vmatpush1.msra.mxu0 0.0
    %178 = vmatprep.mubr.f32.mxu0 0.0
    %179 = vmatmul.mubr.f32.gmra.mrb[0].mxu0 %v42
    %v180 = vpop.f32.mrb[0].mxu0
    %v181 = vadd.f32 0.0, %v180
    %v182 = vpop.f32.mrb[0].mxu0
    %183 = vdwg.mxu0
    %v184 = vmul.f32 %v111, 0.001953125
    %v185 = vmul.f32 %v181, 0.001953125
    %v186 = vmul.f32 %v184, %v184
    %v187 = vsub.f32 %v185, %v186
    %v188 = vmax.f32 %v187, 0.0
    %v189 = vadd.f32 %v188, 1e-05
    %v190 = vrsqrt.pop %v189
    %v191 = vld [vmem:[%s1] sm:$0xff]
    %v192 = vld [vmem:[%s2] sm:$0xff]
    %v193 = vmul.f32 %v190, %v191
    %v194 = vmul.f32 %v184, %v193
    %v195 = vsub.f32 %v192, %v194
    %197 = vset.pattern.permute.xlu0 0
    %198 = vperm.xlu0 %197, %v193
    %v199 = vpop.permute.xlu0 %198
    %v201 = vmul.f32 %v15, %v199
    %v202 = vmul.f32 %v16, %v199
    %204 = vset.pattern.permute.xlu0 0
    %205 = vperm.xlu0 %204, %v195
    %v206 = vpop.permute.xlu0 %205
    %v208 = vadd.f32 %v201, %v206
    %v209 = vadd.f32 %v202, %v206
    %210 = vst [vmem:[#allocation2] sm:$0xff] %v208
    %211 = vst [vmem:[#allocation2 + $0x8] sm:$0xff] %v209
    // Predicated region
    $region14: #{tpu_custom_call.1} parent=1 // pred_check
      _
    $region15: #{tpu_custom_call.1} parent=1 // pred_check_branch
      %213 = sbr.rel (0) target = $region17
    $region16: #{tpu_custom_call.1} parent=1 // pred_region
      %s215 = ssub.s32 256, 256
      %216 = vsyncadd [#allocation3], %s215
      %s218 = sshll.u32 [#allocation2], 4
      %s219 = int_to_ptr.vmem [resolvable:$true] %s218
      %221 = dma.vmem_to_hbm [thread:$0]  %s219, 256, %s3, [#allocation3]
    $region17: #{tpu_custom_call.1} parent=1 // pred_fallthru
      _
    // Predicated region
    $region18: #{tpu_custom_call.1} parent=1 // pred_check
      _
    $region19: #{tpu_custom_call.1} parent=1 // pred_check_branch
      %223 = sbr.rel (0) target = $region21
    $region20: #{tpu_custom_call.1} parent=1 // pred_region
      %224 = dma.done [#allocation3], 256
    $region21: #{tpu_custom_call.1} parent=1 // pred_fallthru
      _
    %225 = vsyncpa [#allocation3], 1

</llo_original>
